<compile_context>
chip_gen: v6e
topology: v6e:2x2x1
jax: 0.10.0
libtpu: 0.0.40
codegen_flags: <defaults>
</compile_context>

<pallas_src>
import functools

import jax
import jax.numpy as jnp
from jax.experimental import pallas as pl
from jax.experimental.pallas import tpu as pltpu


def _round_up(x, m):
    return (x + m - 1) // m * m


# ----------------------------------------------------------------------------
# Fused Pallas kernel: full VAE forward in one launch
# ----------------------------------------------------------------------------
def _fused_vae_kernel(B, offs, x_ref, sty4_ref, eps_ref, p_ref, rec_ref, enc_ref):
    f32 = jnp.float32

    def blk(name):
        r, h, w = offs[name]          # static python ints -> static slices
        return p_ref[r:r + h, :w]

    x = x_ref[...]                                                     # (2B, G) rows 0:B=con, B:2B=sti

    # --- encoder layer 1: content ‖ style weights fused along output lanes ---
    h1 = jnp.maximum(
        jnp.dot(x, blk("w1e"), preferred_element_type=f32) + blk("b1e"), 0.0)   # (2B, 2H)

    # --- encoder layer 2: block-diagonal weights -> lane-contiguous mu / logvar ---
    mu = jnp.dot(h1, blk("wmu"), preferred_element_type=f32) + blk("bmu")       # (2B, LC+LS) = [mu_c | mu_s]
    lv = jnp.dot(h1, blk("wlv"), preferred_element_type=f32) + blk("blv")       # (2B, LC+LS) = [lv_c | lv_s]

    # --- reparameterization, in vregs (exp -> EUP); eps laid out as [eps_c | eps_s] ---
    z = mu + jnp.exp(0.5 * lv) * eps_ref[...]                                   # (2B, LC+LS)

    # --- decoder layer 1: weights split by input rows -> no lane-axis concat ---
    c_con = jnp.dot(z, blk("wdc"), preferred_element_type=f32)    # content-latent contribution (2B, H)
    s_con = jnp.dot(z, blk("wds"), preferred_element_type=f32)    # style-latent contribution   (2B, H)
    y_con = jnp.dot(sty4_ref[...], blk("wdy"), preferred_element_type=f32)      # (4B, H)

    # 4 decoder passes stacked along rows (sublane concat only):
    #   real con, real sti, fake con (z_c from sti, z_s from con), fake sti
    lat = jnp.concatenate([
        c_con[:B] + s_con[:B],
        c_con[B:] + s_con[B:],
        c_con[B:] + s_con[:B],
        c_con[:B] + s_con[B:],
    ], axis=0)                                                                   # (4B, H)
    hd = jnp.maximum(lat + y_con + blk("b1d"), 0.0)
    rec = jnp.dot(hd, blk("w2d"), preferred_element_type=f32) + blk("b2d")       # (4B, G)

    rec_ref[...] = rec.astype(rec_ref.dtype)
    # rows 0:2B = mu, rows 2B:4B = logvar (row concat is sublane-axis, cheap)
    enc_ref[...] = jnp.concatenate([mu, lv], axis=0).astype(enc_ref.dtype)


# ----------------------------------------------------------------------------
# Parameter packing (done once at init): 12 arrays -> one (rows, 128) slab
# ----------------------------------------------------------------------------
def pack_vae_params(p, G, STY, H, LC, LS):
    f32 = jnp.float32
    pc, ps, pd = p["enc_con"], p["enc_sty"], p["dec"]
    w1c, b1c, w2c, b2c = pc["w1"], pc["b1"], pc["w2"], pc["b2"]
    w1s, b1s, w2s, b2s = ps["w1"], ps["b1"], ps["w2"], ps["b2"]
    w1d, b1d, w2d, b2d = pd["w1"], pd["b1"], pd["w2"], pd["b2"]

    zcs = jnp.zeros((H, LS), f32)
    zsc = jnp.zeros((H, LC), f32)
    blocks = [
        # encoder layer 1 fused: [w1c | w1s]
        ("w1e", jnp.concatenate([w1c, w1s], axis=1)),
        ("b1e", jnp.concatenate([b1c, b1s], axis=1)),
        # encoder layer 2 block-diagonal mu / logvar
        ("wmu", jnp.concatenate([jnp.concatenate([w2c[:, :LC], zcs], axis=1),
                                 jnp.concatenate([zsc, w2s[:, :LS]], axis=1)], axis=0)),
        ("bmu", jnp.concatenate([b2c[:, :LC], b2s[:, :LS]], axis=1)),
        ("wlv", jnp.concatenate([jnp.concatenate([w2c[:, LC:], zcs], axis=1),
                                 jnp.concatenate([zsc, w2s[:, LS:]], axis=1)], axis=0)),
        ("blv", jnp.concatenate([b2c[:, LC:], b2s[:, LS:]], axis=1)),
        # decoder layer 1 split by input rows (content / style / sty one-hot)
        ("wdc", jnp.concatenate([w1d[:LC], jnp.zeros((LS, H), f32)], axis=0)),
        ("wds", jnp.concatenate([jnp.zeros((LC, H), f32), w1d[LC:LC + LS]], axis=0)),
        ("wdy", w1d[LC + LS:]),
        ("b1d", b1d),
        # decoder layer 2
        ("w2d", w2d),
        ("b2d", b2d),
    ]
    width = _round_up(max(a.shape[1] for _, a in blocks), 128)   # lane-dense slab
    offs, rows, r = {}, [], 0
    for name, a in blocks:
        h, w = a.shape
        offs[name] = (r, h, w)
        hp = _round_up(h, 8)                                     # 8-sublane-aligned offsets
        rows.append(jnp.zeros((hp, width), f32).at[:h, :w].set(a.astype(f32)))
        r += hp
    return jnp.concatenate(rows, axis=0), offs


# ----------------------------------------------------------------------------
# Wrapper: single pallas_call, logical outputs sliced from the two small slabs
# ----------------------------------------------------------------------------
def make_vae_forward(offs, *, lat_con, lat_sty):
    LC, LS = lat_con, lat_sty

    def fwd(param_slab, con, sti, sty, eps):
        B, G = con.shape
        x = jnp.concatenate([con, sti], axis=0)            # (2B, G)  wrapper-side, fused by XLA
        sty4 = jnp.concatenate([sty, sty, sty, sty], axis=0)  # (4B, STY)

        kernel = functools.partial(_fused_vae_kernel, B, offs)
        vmem = pl.BlockSpec(memory_space=pltpu.MemorySpace.VMEM)
        rec, enc = pl.pallas_call(
            kernel,
            out_shape=(jax.ShapeDtypeStruct((4 * B, G), jnp.float32),
                       jax.ShapeDtypeStruct((4 * B, LC + LS), jnp.float32)),
            in_specs=[vmem] * 4,
            out_specs=(vmem, vmem),
        )(x, sty4, eps, param_slab)

        mu, lv = enc[:2 * B], enc[2 * B:]
        return {
            "mu_con_con": mu[:B, :LC], "var_con_con": lv[:B, :LC],
            "mu_sti_con": mu[B:, :LC], "var_sti_con": lv[B:, :LC],
            "mu_con_sty": mu[:B, LC:], "var_con_sty": lv[:B, LC:],
            "mu_sti_sty": mu[B:, LC:], "var_sti_sty": lv[B:, LC:],
            "real_con_recon": rec[0 * B:1 * B],
            "real_sti_recon": rec[1 * B:2 * B],
            "fake_con_recon": rec[2 * B:3 * B],
            "fake_sti_recon": rec[3 * B:4 * B],
        }

    return jax.jit(fwd)


# ----------------------------------------------------------------------------
# Deterministic parameter initialization (raw "PyTorch-like" layout)
# ----------------------------------------------------------------------------
def init_linear(key, din, dout, scale=0.1):
    w = scale * jax.random.normal(key, (din, dout), dtype=jnp.float32)
    b = jnp.zeros((1, dout), dtype=jnp.float32)
    return w, b


def init_mlp2(key, din, hidden, dout):
    k1, k2 = jax.random.split(key)
    w1, b1 = init_linear(k1, din, hidden)
    w2, b2 = init_linear(k2, hidden, dout)
    return dict(w1=w1, b1=b1, w2=w2, b2=b2)


def init_vae_params(key, gene_dim, sty_dim, hidden, lat_con, lat_sty):
    ks = jax.random.split(key, 3)
    return dict(
        enc_con=init_mlp2(ks[0], gene_dim, hidden, 2 * lat_con),
        enc_sty=init_mlp2(ks[1], gene_dim, hidden, 2 * lat_sty),
        dec=init_mlp2(ks[2], lat_con + lat_sty + sty_dim, hidden, gene_dim),
    )


# ----------------------------------------------------------------------------
# Pure-JAX reference (for correctness check only)
# ----------------------------------------------------------------------------
def _mlp2_ref(p, x):
    h = jnp.maximum(x @ p["w1"] + p["b1"], 0.0)
    return h @ p["w2"] + p["b2"]


def vae_forward_ref(params, con, sti, sty, eps, *, lat_con, lat_sty):
    B = con.shape[0]
    LC, LS = lat_con, lat_sty
    ec_con = _mlp2_ref(params["enc_con"], con)
    ec_sti = _mlp2_ref(params["enc_con"], sti)
    es_con = _mlp2_ref(params["enc_sty"], con)
    es_sti = _mlp2_ref(params["enc_sty"], sti)
    mu_cc, lv_cc = ec_con[:, :LC], ec_con[:, LC:]
    mu_sc, lv_sc = ec_sti[:, :LC], ec_sti[:, LC:]
    mu_cs, lv_cs = es_con[:, :LS], es_con[:, LS:]
    mu_ss, lv_ss = es_sti[:, :LS], es_sti[:, LS:]
    eps_c, eps_s = eps[:, :LC], eps[:, LC:]
    z_cc = mu_cc + jnp.exp(0.5 * lv_cc) * eps_c[:B]
    z_sc = mu_sc + jnp.exp(0.5 * lv_sc) * eps_c[B:]
    z_cs = mu_cs + jnp.exp(0.5 * lv_cs) * eps_s[:B]
    z_ss = mu_ss + jnp.exp(0.5 * lv_ss) * eps_s[B:]
    dec = lambda zc, zs: _mlp2_ref(params["dec"],
                                   jnp.concatenate([zc, zs, sty], axis=1))
    return {
        "mu_con_con": mu_cc, "var_con_con": lv_cc,
        "mu_sti_con": mu_sc, "var_sti_con": lv_sc,
        "mu_con_sty": mu_cs, "var_con_sty": lv_cs,
        "mu_sti_sty": mu_ss, "var_sti_sty": lv_ss,
        "real_con_recon": dec(z_cc, z_cs),
        "real_sti_recon": dec(z_sc, z_ss),
        "fake_con_recon": dec(z_sc, z_cs),
        "fake_sti_recon": dec(z_cc, z_ss),
    }


# ----------------------------------------------------------------------------
# Main
# ----------------------------------------------------------------------------
if __name__ == "__main__":
    B = 8          # batch per domain (multiple of 8 to stay sublane-aligned)
    GENES = 32     # expression feature dim
    STY = 4        # style / condition one-hot dim
    HIDDEN = 32
    LAT_CON = 8
    LAT_STY = 8

    root = jax.random.PRNGKey(0)
    k_par, k_con, k_sti, k_sty, k_eps = jax.random.split(root, 5)

    params = init_vae_params(k_par, GENES, STY, HIDDEN, LAT_CON, LAT_STY)
    param_slab, offs = pack_vae_params(params, GENES, STY, HIDDEN, LAT_CON, LAT_STY)

    con = jax.random.normal(k_con, (B, GENES), dtype=jnp.float32)
    sti = jax.random.normal(k_sti, (B, GENES), dtype=jnp.float32)
    sty = jax.nn.one_hot(
        jax.random.randint(k_sty, (B,), 0, STY), STY, dtype=jnp.float32)
    # eps layout: rows 0:B <-> con, B:2B <-> sti; cols 0:LC content, LC: style.
    # (torch.randn in the reference cannot be bit-matched.)
    eps = jax.random.normal(k_eps, (2 * B, LAT_CON + LAT_STY), dtype=jnp.float32)

    fwd = make_vae_forward(offs, lat_con=LAT_CON, lat_sty=LAT_STY)
    out = jax.block_until_ready(fwd(param_slab, con, sti, sty, eps))

    # correctness vs pure-JAX reference + sanity checks
    ref = vae_forward_ref(params, con, sti, sty, eps,
                          lat_con=LAT_CON, lat_sty=LAT_STY)
    for name, r in ref.items():
        o = out[name]
        assert o.shape == r.shape, name
        assert bool(jnp.all(jnp.isfinite(o))), name
        assert bool(jnp.allclose(o, r, atol=2e-3, rtol=2e-3)), name

    print("KERNEL_OK")
</pallas_src>

<mosaic_0001>
module attributes {stable_mosaic.version = 11 : i64} {
  func.func @_fused_vae_kernel(%arg0: memref<16x32xf32, #tpu.memory_space<vmem>>, %arg1: memref<32x4xf32, #tpu.memory_space<vmem>>, %arg2: memref<16x16xf32, #tpu.memory_space<vmem>>, %arg3: memref<272x128xf32, #tpu.memory_space<vmem>>, %arg4: memref<32x32xf32, #tpu.memory_space<vmem>>, %arg5: memref<32x16xf32, #tpu.memory_space<vmem>>) attributes {dimension_semantics = [], scalar_prefetch = 0 : i64, scratch_operands = 0 : i64, tpu.core_type = #tpu.core_type<tc>} {
    %c0 = arith.constant 0 : index
    %c0_0 = arith.constant 0 : index
    %0 = vector.load %arg0[%c0, %c0_0] : memref<16x32xf32, #tpu.memory_space<vmem>>, vector<16x32xf32>
    %c0_1 = arith.constant 0 : index
    %c0_2 = arith.constant 0 : index
    %1 = vector.load %arg3[%c0_1, %c0_2] : memref<272x128xf32, #tpu.memory_space<vmem>>, vector<32x64xf32>
    %cst = arith.constant dense<0.000000e+00> : vector<16x64xf32>
    %2 = tpu.matmul %0, %1, %cst {dimension_numbers = #tpu.dot_dimension_numbers<[1], [0], [0], [1], [0, 0, 1, 1], [], []>} : vector<16x32xf32>, vector<32x64xf32>, vector<16x64xf32> -> vector<16x64xf32>
    %c32 = arith.constant 32 : index
    %c0_3 = arith.constant 0 : index
    %3 = vector.load %arg3[%c32, %c0_3] : memref<272x128xf32, #tpu.memory_space<vmem>>, vector<1x64xf32>
    %4 = vector.broadcast %3 : vector<1x64xf32> to vector<16x64xf32>
    %5 = arith.addf %2, %4 : vector<16x64xf32>
    %cst_4 = arith.constant 0.000000e+00 : f32
    %6 = vector.broadcast %cst_4 : f32 to vector<16x64xf32>
    %7 = arith.maximumf %5, %6 : vector<16x64xf32>
    %c40 = arith.constant 40 : index
    %c0_5 = arith.constant 0 : index
    %8 = vector.load %arg3[%c40, %c0_5] : memref<272x128xf32, #tpu.memory_space<vmem>>, vector<64x16xf32>
    %cst_6 = arith.constant dense<0.000000e+00> : vector<16x16xf32>
    %9 = tpu.matmul %7, %8, %cst_6 {dimension_numbers = #tpu.dot_dimension_numbers<[1], [0], [0], [1], [0, 0, 1, 1], [], []>} : vector<16x64xf32>, vector<64x16xf32>, vector<16x16xf32> -> vector<16x16xf32>
    %c104 = arith.constant 104 : index
    %c0_7 = arith.constant 0 : index
    %10 = vector.load %arg3[%c104, %c0_7] : memref<272x128xf32, #tpu.memory_space<vmem>>, vector<1x16xf32>
    %11 = vector.broadcast %10 : vector<1x16xf32> to vector<16x16xf32>
    %12 = arith.addf %9, %11 : vector<16x16xf32>
    %c112 = arith.constant 112 : index
    %c0_8 = arith.constant 0 : index
    %13 = vector.load %arg3[%c112, %c0_8] : memref<272x128xf32, #tpu.memory_space<vmem>>, vector<64x16xf32>
    %cst_9 = arith.constant dense<0.000000e+00> : vector<16x16xf32>
    %14 = tpu.matmul %7, %13, %cst_9 {dimension_numbers = #tpu.dot_dimension_numbers<[1], [0], [0], [1], [0, 0, 1, 1], [], []>} : vector<16x64xf32>, vector<64x16xf32>, vector<16x16xf32> -> vector<16x16xf32>
    %c176 = arith.constant 176 : index
    %c0_10 = arith.constant 0 : index
    %15 = vector.load %arg3[%c176, %c0_10] : memref<272x128xf32, #tpu.memory_space<vmem>>, vector<1x16xf32>
    %16 = vector.broadcast %15 : vector<1x16xf32> to vector<16x16xf32>
    %17 = arith.addf %14, %16 : vector<16x16xf32>
    %cst_11 = arith.constant 5.000000e-01 : f32
    %18 = vector.broadcast %cst_11 : f32 to vector<16x16xf32>
    %19 = arith.mulf %18, %17 : vector<16x16xf32>
    %20 = math.exp %19 : vector<16x16xf32>
    %c0_12 = arith.constant 0 : index
    %c0_13 = arith.constant 0 : index
    %21 = vector.load %arg2[%c0_12, %c0_13] : memref<16x16xf32, #tpu.memory_space<vmem>>, vector<16x16xf32>
    %22 = arith.mulf %20, %21 : vector<16x16xf32>
    %23 = arith.addf %12, %22 : vector<16x16xf32>
    %c184 = arith.constant 184 : index
    %c0_14 = arith.constant 0 : index
    %24 = vector.load %arg3[%c184, %c0_14] : memref<272x128xf32, #tpu.memory_space<vmem>>, vector<16x32xf32>
    %cst_15 = arith.constant dense<0.000000e+00> : vector<16x32xf32>
    %25 = tpu.matmul %23, %24, %cst_15 {dimension_numbers = #tpu.dot_dimension_numbers<[1], [0], [0], [1], [0, 0, 1, 1], [], []>} : vector<16x16xf32>, vector<16x32xf32>, vector<16x32xf32> -> vector<16x32xf32>
    %c200 = arith.constant 200 : index
    %c0_16 = arith.constant 0 : index
    %26 = vector.load %arg3[%c200, %c0_16] : memref<272x128xf32, #tpu.memory_space<vmem>>, vector<16x32xf32>
    %cst_17 = arith.constant dense<0.000000e+00> : vector<16x32xf32>
    %27 = tpu.matmul %23, %26, %cst_17 {dimension_numbers = #tpu.dot_dimension_numbers<[1], [0], [0], [1], [0, 0, 1, 1], [], []>} : vector<16x16xf32>, vector<16x32xf32>, vector<16x32xf32> -> vector<16x32xf32>
    %c0_18 = arith.constant 0 : index
    %c0_19 = arith.constant 0 : index
    %28 = vector.load %arg1[%c0_18, %c0_19] : memref<32x4xf32, #tpu.memory_space<vmem>>, vector<32x4xf32>
    %c216 = arith.constant 216 : index
    %c0_20 = arith.constant 0 : index
    %29 = vector.load %arg3[%c216, %c0_20] : memref<272x128xf32, #tpu.memory_space<vmem>>, vector<4x32xf32>
    %cst_21 = arith.constant dense<0.000000e+00> : vector<32x32xf32>
    %30 = tpu.matmul %28, %29, %cst_21 {dimension_numbers = #tpu.dot_dimension_numbers<[1], [0], [0], [1], [0, 0, 1, 1], [], []>} : vector<32x4xf32>, vector<4x32xf32>, vector<32x32xf32> -> vector<32x32xf32>
    %31 = vector.extract_strided_slice %25 {offsets = [0, 0], sizes = [8, 32], strides = [1, 1]} : vector<16x32xf32> to vector<8x32xf32>
    %32 = vector.extract_strided_slice %27 {offsets = [0, 0], sizes = [8, 32], strides = [1, 1]} : vector<16x32xf32> to vector<8x32xf32>
    %33 = arith.addf %31, %32 : vector<8x32xf32>
    %34 = vector.extract_strided_slice %25 {offsets = [8, 0], sizes = [8, 32], strides = [1, 1]} : vector<16x32xf32> to vector<8x32xf32>
    %35 = vector.extract_strided_slice %27 {offsets = [8, 0], sizes = [8, 32], strides = [1, 1]} : vector<16x32xf32> to vector<8x32xf32>
    %36 = arith.addf %34, %35 : vector<8x32xf32>
    %37 = vector.extract_strided_slice %25 {offsets = [8, 0], sizes = [8, 32], strides = [1, 1]} : vector<16x32xf32> to vector<8x32xf32>
    %38 = vector.extract_strided_slice %27 {offsets = [0, 0], sizes = [8, 32], strides = [1, 1]} : vector<16x32xf32> to vector<8x32xf32>
    %39 = arith.addf %37, %38 : vector<8x32xf32>
    %40 = vector.extract_strided_slice %25 {offsets = [0, 0], sizes = [8, 32], strides = [1, 1]} : vector<16x32xf32> to vector<8x32xf32>
    %41 = vector.extract_strided_slice %27 {offsets = [8, 0], sizes = [8, 32], strides = [1, 1]} : vector<16x32xf32> to vector<8x32xf32>
    %42 = arith.addf %40, %41 : vector<8x32xf32>
    %43 = tpu.concatenate %33, %36, %39, %42 in 0 : vector<8x32xf32>, vector<8x32xf32>, vector<8x32xf32>, vector<8x32xf32> -> vector<32x32xf32>
    %44 = arith.addf %43, %30 : vector<32x32xf32>
    %c224 = arith.constant 224 : index
    %c0_22 = arith.constant 0 : index
    %45 = vector.load %arg3[%c224, %c0_22] : memref<272x128xf32, #tpu.memory_space<vmem>>, vector<1x32xf32>
    %46 = vector.broadcast %45 : vector<1x32xf32> to vector<32x32xf32>
    %47 = arith.addf %44, %46 : vector<32x32xf32>
    %cst_23 = arith.constant 0.000000e+00 : f32
    %48 = vector.broadcast %cst_23 : f32 to vector<32x32xf32>
    %49 = arith.maximumf %47, %48 : vector<32x32xf32>
    %c232 = arith.constant 232 : index
    %c0_24 = arith.constant 0 : index
    %50 = vector.load %arg3[%c232, %c0_24] : memref<272x128xf32, #tpu.memory_space<vmem>>, vector<32x32xf32>
    %cst_25 = arith.constant dense<0.000000e+00> : vector<32x32xf32>
    %51 = tpu.matmul %49, %50, %cst_25 {dimension_numbers = #tpu.dot_dimension_numbers<[1], [0], [0], [1], [0, 0, 1, 1], [], []>} : vector<32x32xf32>, vector<32x32xf32>, vector<32x32xf32> -> vector<32x32xf32>
    %c264 = arith.constant 264 : index
    %c0_26 = arith.constant 0 : index
    %52 = vector.load %arg3[%c264, %c0_26] : memref<272x128xf32, #tpu.memory_space<vmem>>, vector<1x32xf32>
    %53 = vector.broadcast %52 : vector<1x32xf32> to vector<32x32xf32>
    %54 = arith.addf %51, %53 : vector<32x32xf32>
    %c0_27 = arith.constant 0 : index
    %c0_28 = arith.constant 0 : index
    %55 = vector.load %arg4[%c0_27, %c0_28] : memref<32x32xf32, #tpu.memory_space<vmem>>, vector<32x32xf32>
    tpu.vector_store %arg4[%c0_27, %c0_28], %54 {strides = array<i32>} : memref<32x32xf32, #tpu.memory_space<vmem>>, vector<32x32xf32>,
    %56 = tpu.concatenate %12, %17 in 0 : vector<16x16xf32>, vector<16x16xf32> -> vector<32x16xf32>
    %c0_29 = arith.constant 0 : index
    %c0_30 = arith.constant 0 : index
    %57 = vector.load %arg5[%c0_29, %c0_30] : memref<32x16xf32, #tpu.memory_space<vmem>>, vector<32x16xf32>
    tpu.vector_store %arg5[%c0_29, %c0_30], %56 {strides = array<i32>} : memref<32x16xf32, #tpu.memory_space<vmem>>, vector<32x16xf32>,
    return
  }
}

</mosaic_0001>

<llo_original>
// kernel: fwd.1
$region0: #{fwd.1}
  #allocation0 [shape = 'u32[]', space=smem, size = 0x4, offset = 0x4, fixed_abs, tag = 'smem constant byte address 0x4 - core index']
  #allocation1 [shape = 'u32[144,128]{1,0:T(1,128)}', space=vmem, size = 0x12000, scoped, tag = 'internal scratch']
  %s0 = inlined_call_operand.vmem [shape: f32[16,32], index: 0, kind: input, shape index: {}]
  %s1 = inlined_call_operand.vmem [shape: f32[32,4], index: 1, kind: input, shape index: {}]
  %s2 = inlined_call_operand.vmem [shape: f32[16,16], index: 2, kind: input, shape index: {}]
  %s3 = inlined_call_operand.hbm [shape: f32[272,128], index: 3, kind: input, shape index: {}]
  %s4 = inlined_call_operand.vmem [shape: f32[32,32], index: 4, kind: output, shape index: {0}]
  %s5 = inlined_call_operand.vmem [shape: f32[32,16], index: 5, kind: output, shape index: {1}]
  %6 = xla_tuple %s4, %s5
  %s7 = sld [smem:[#allocation0]]
  $region38: #{fwd.1} parent=0
    _
  %s9 = ssub.s32 1, %s7
  %s10 = scalar_select 0, %s9, %s7
  $region1: #{fwd.1} parent=0
    #allocation2 [shape = 'u8[139264]{0}', space=vmem, size = 0x22000, scoped, tag = 'input window, operand 3, single buffered']
    #allocation3 [shape = 's32[1]{0}', space=sflag, size = 0x4, scoped, tag = 'scoped memory for fwd.1']
    %11 = vsyncpa [#allocation3], 0
    // Predicated region
    $region2: #{fwd.1} parent=1 // pred_check
      _
    $region3: #{fwd.1} parent=1 // pred_check_branch
      %13 = sbr.rel (0) target = $region5
    $region4: #{fwd.1} parent=1 // pred_region
      _
    $region5: #{fwd.1} parent=1 // pred_fallthru
      _
    // Predicated region
    $region6: #{fwd.1} parent=1 // pred_check
      _
    $region7: #{fwd.1} parent=1 // pred_check_branch
      %15 = sbr.rel (0) target = $region9
    $region8: #{fwd.1} parent=1 // pred_region
      _
    $region9: #{fwd.1} parent=1 // pred_fallthru
      _
    // Predicated region
    $region10: #{fwd.1} parent=1 // pred_check
      _
    $region11: #{fwd.1} parent=1 // pred_check_branch
      %17 = sbr.rel (0) target = $region13
    $region12: #{fwd.1} parent=1 // pred_region
      _
    $region13: #{fwd.1} parent=1 // pred_fallthru
      _
    // Predicated region
    $region14: #{fwd.1} parent=1 // pred_check
      _
    $region15: #{fwd.1} parent=1 // pred_check_branch
      %19 = sbr.rel (0) target = $region17
    $region16: #{fwd.1} parent=1 // pred_region
      %s21 = ssub.s32 4352, 4352
      %22 = vsyncadd [#allocation3], %s21
      %s23 = sshll.u32 [#allocation2], 4
      %s24 = int_to_ptr.vmem [resolvable:$true] %s23
      %29 = dma.hbm_to_vmem [thread:$0]  %s3, 4352, %s24, [#allocation3], 128, 128, 8
    $region17: #{fwd.1} parent=1 // pred_fallthru
      _
    // Predicated region
    $region18: #{fwd.1} parent=1 // pred_check
      _
    $region19: #{fwd.1} parent=1 // pred_check_branch
      %31 = sbr.rel (0) target = $region21
    $region20: #{fwd.1} parent=1 // pred_region
      %32 = dma.done [#allocation3], 4352
    $region21: #{fwd.1} parent=1 // pred_fallthru
      _
    %v33 = vld [vmem:[%s0] sm:$0xff]
    %v34 = vld [vmem:[%s0 + $0x8] sm:$0xff]
    %v35 = vld [vmem:[#allocation2] sm:$0xff]
    %v36 = vld [vmem:[#allocation2 + $0x8] sm:$0xff]
    %v37 = vld [vmem:[#allocation2 + $0x10] sm:$0xff]
    %v38 = vld [vmem:[#allocation2 + $0x18] sm:$0xff]
    %v39 = vld [vmem:[#allocation2 + $0x20] sm:$0x1]
    %v40 = vlaneseq
    %v41 = vshrl.u32 %v40, 7
    %v42 = vsub.s32 0, %v41
    %v43 = vrot.slane %v39, %v42
    %vm44 = vcmask 261120
    %v46 = vsel %vm44, %v33, 0
    %v49 = vsel %vm44, %v34, 0
    %51 = vmatprep.subr.mxu0 0.0
    %52 = vmatpush1.msra.mxu0 0.0
    %53 = vmatprep.subr.mxu0 0.0
    %54 = vmatpush1.msra.mxu0 0.0
    %55 = vmatprep.subr.mxu0 0.0
    %56 = vmatpush1.msra.mxu0 0.0
    %57 = vmatprep.subr.mxu0 0.0
    %58 = vmatpush1.msra.mxu0 0.0
    %59 = vmatprep.subr.mxu0 0.0
    %60 = vmatpush1.msra.mxu0 0.0
    %61 = vmatprep.subr.mxu0 0.0
    %62 = vmatpush1.msra.mxu0 0.0
    %63 = vmatprep.subr.mxu0 0.0
    %64 = vmatpush1.msra.mxu0 0.0
    %65 = vmatprep.subr.mxu0 0.0
    %66 = vmatpush1.msra.mxu0 0.0
    %67 = vmatprep.subr.mxu0 0.0
    %68 = vmatpush1.msra.mxu0 0.0
    %69 = vmatprep.subr.mxu0 0.0
    %70 = vmatpush1.msra.mxu0 0.0
    %71 = vmatprep.subr.mxu0 0.0
    %72 = vmatpush1.msra.mxu0 0.0
    %73 = vmatprep.subr.mxu0 0.0
    %74 = vmatpush1.msra.mxu0 0.0
    %75 = vmatprep.subr.mxu0 0.0
    %76 = vmatpush1.msra.mxu0 %v38
    %77 = vmatprep.subr.mxu0 0.0
    %78 = vmatpush1.msra.mxu0 %v37
    %79 = vmatprep.subr.mxu0 0.0
    %80 = vmatpush1.msra.mxu0 %v36
    %81 = vmatprep.subr.mxu0 0.0
    %82 = vmatpush1.msra.mxu0 %v35
    %83 = vmatprep.subr.mxu0 0.0
    %84 = vmatpush2.msra.mxu0 0.0
    %85 = vmatprep.subr.mxu0 0.0
    %86 = vmatpush2.msra.mxu0 0.0
    %87 = vmatprep.subr.mxu0 0.0
    %88 = vmatpush2.msra.mxu0 0.0
    %89 = vmatprep.subr.mxu0 0.0
    %90 = vmatpush2.msra.mxu0 0.0
    %91 = vmatprep.subr.mxu0 0.0
    %92 = vmatpush2.msra.mxu0 0.0
    %93 = vmatprep.subr.mxu0 0.0
    %94 = vmatpush2.msra.mxu0 0.0
    %95 = vmatprep.subr.mxu0 0.0
    %96 = vmatpush2.msra.mxu0 0.0
    %97 = vmatprep.subr.mxu0 0.0
    %98 = vmatpush2.msra.mxu0 0.0
    %99 = vmatprep.subr.mxu0 0.0
    %100 = vmatpush2.msra.mxu0 0.0
    %101 = vmatprep.subr.mxu0 0.0
    %102 = vmatpush2.msra.mxu0 0.0
    %103 = vmatprep.subr.mxu0 0.0
    %104 = vmatpush2.msra.mxu0 0.0
    %105 = vmatprep.subr.mxu0 0.0
    %106 = vmatpush2.msra.mxu0 0.0
    %107 = vmatprep.subr.mxu0 0.0
    %108 = vmatpush2.msra.mxu0 0.0
    %109 = vmatprep.subr.mxu0 0.0
    %110 = vmatpush2.msra.mxu0 0.0
    %111 = vmatprep.subr.mxu0 0.0
    %112 = vmatpush2.msra.mxu0 0.0
    %113 = vmatprep.subr.mxu0 0.0
    %114 = vmatpush2.msra.mxu0 0.0
    %115 = vmatprep.mubr.f32.mxu0 0.0
    %116 = vmatmul.mubr.f32.gmra.mxu0 %v46
    %v117 = vpop.f32.mrf.mxu0
    %v118 = vadd.f32 %v43, %v117
    %v119 = vpop.f32.mrf.mxu0
    %120 = vmatprep.mubr.f32.mxu0 0.0
    %121 = vmatmul.mubr.f32.gmra.mxu0 %v49
    %v122 = vpop.f32.mrf.mxu0
    %v123 = vadd.f32 %v43, %v122
    %v124 = vpop.f32.mrf.mxu0
    %125 = vdwg.mxu0
    %v126 = vmax.f32 %v118, 0.0
    %v127 = vmax.f32 %v123, 0.0
    %v128 = vld [vmem:[#allocation2 + $0x28] sm:$0xff]
    %v129 = vld [vmem:[#allocation2 + $0x30] sm:$0xff]
    %v130 = vld [vmem:[#allocation2 + $0x38] sm:$0xff]
    %v131 = vld [vmem:[#allocation2 + $0x40] sm:$0xff]
    %v132 = vld [vmem:[#allocation2 + $0x48] sm:$0xff]
    %v133 = vld [vmem:[#allocation2 + $0x50] sm:$0xff]
    %v134 = vld [vmem:[#allocation2 + $0x58] sm:$0xff]
    %v135 = vld [vmem:[#allocation2 + $0x60] sm:$0xff]
    %v136 = vld [vmem:[#allocation2 + $0x68] sm:$0x1]
    %v137 = vlaneseq
    %v138 = vshrl.u32 %v137, 7
    %v139 = vsub.s32 0, %v138
    %v140 = vrot.slane %v136, %v139
    %vm141 = vcmask 523264
    %v143 = vsel %vm141, %v126, 0
    %v146 = vsel %vm141, %v127, 0
    %148 = vmatprep.subr.mxu0 0.0
    %149 = vmatpush1.msra.mxu0 0.0
    %150 = vmatprep.subr.mxu0 0.0
    %151 = vmatpush1.msra.mxu0 0.0
    %152 = vmatprep.subr.mxu0 0.0
    %153 = vmatpush1.msra.mxu0 0.0
    %154 = vmatprep.subr.mxu0 0.0
    %155 = vmatpush1.msra.mxu0 0.0
    %156 = vmatprep.subr.mxu0 0.0
    %157 = vmatpush1.msra.mxu0 0.0
    %158 = vmatprep.subr.mxu0 0.0
    %159 = vmatpush1.msra.mxu0 0.0
    %160 = vmatprep.subr.mxu0 0.0
    %161 = vmatpush1.msra.mxu0 0.0
    %162 = vmatprep.subr.mxu0 0.0
    %163 = vmatpush1.msra.mxu0 0.0
    %164 = vmatprep.subr.mxu0 0.0
    %165 = vmatpush1.msra.mxu0 %v135
    %166 = vmatprep.subr.mxu0 0.0
    %167 = vmatpush1.msra.mxu0 %v134
    %168 = vmatprep.subr.mxu0 0.0
    %169 = vmatpush1.msra.mxu0 %v133
    %170 = vmatprep.subr.mxu0 0.0
    %171 = vmatpush1.msra.mxu0 %v132
    %172 = vmatprep.subr.mxu0 0.0
    %173 = vmatpush1.msra.mxu0 %v131
    %174 = vmatprep.subr.mxu0 0.0
    %175 = vmatpush1.msra.mxu0 %v130
    %176 = vmatprep.subr.mxu0 0.0
    %177 = vmatpush1.msra.mxu0 %v129
    %178 = vmatprep.subr.mxu0 0.0
    %179 = vmatpush1.msra.mxu0 %v128
    %180 = vmatprep.subr.mxu0 0.0
    %181 = vmatpush2.msra.mxu0 0.0
    %182 = vmatprep.subr.mxu0 0.0
    %183 = vmatpush2.msra.mxu0 0.0
    %184 = vmatprep.subr.mxu0 0.0
    %185 = vmatpush2.msra.mxu0 0.0
    %186 = vmatprep.subr.mxu0 0.0
    %187 = vmatpush2.msra.mxu0 0.0
    %188 = vmatprep.subr.mxu0 0.0
    %189 = vmatpush2.msra.mxu0 0.0
    %190 = vmatprep.subr.mxu0 0.0
    %191 = vmatpush2.msra.mxu0 0.0
    %192 = vmatprep.subr.mxu0 0.0
    %193 = vmatpush2.msra.mxu0 0.0
    %194 = vmatprep.subr.mxu0 0.0
    %195 = vmatpush2.msra.mxu0 0.0
    %196 = vmatprep.subr.mxu0 0.0
    %197 = vmatpush2.msra.mxu0 0.0
    %198 = vmatprep.subr.mxu0 0.0
    %199 = vmatpush2.msra.mxu0 0.0
    %200 = vmatprep.subr.mxu0 0.0
    %201 = vmatpush2.msra.mxu0 0.0
    %202 = vmatprep.subr.mxu0 0.0
    %203 = vmatpush2.msra.mxu0 0.0
    %204 = vmatprep.subr.mxu0 0.0
    %205 = vmatpush2.msra.mxu0 0.0
    %206 = vmatprep.subr.mxu0 0.0
    %207 = vmatpush2.msra.mxu0 0.0
    %208 = vmatprep.subr.mxu0 0.0
    %209 = vmatpush2.msra.mxu0 0.0
    %210 = vmatprep.subr.mxu0 0.0
    %211 = vmatpush2.msra.mxu0 0.0
    %212 = vmatprep.mubr.f32.mxu0 0.0
    %213 = vmatmul.mubr.f32.gmra.mxu0 %v143
    %v214 = vpop.f32.mrf.mxu0
    %v215 = vadd.f32 %v140, %v214
    %v216 = vpop.f32.mrf.mxu0
    %217 = vmatprep.mubr.f32.mxu0 0.0
    %218 = vmatmul.mubr.f32.gmra.mxu0 %v146
    %v219 = vpop.f32.mrf.mxu0
    %v220 = vadd.f32 %v140, %v219
    %v221 = vpop.f32.mrf.mxu0
    %222 = vdwg.mxu0
    %v223 = vld [vmem:[#allocation2 + $0x70] sm:$0xff]
    %v224 = vld [vmem:[#allocation2 + $0x78] sm:$0xff]
    %v225 = vld [vmem:[#allocation2 + $0x80] sm:$0xff]
    %v226 = vld [vmem:[#allocation2 + $0x88] sm:$0xff]
    %v227 = vld [vmem:[#allocation2 + $0x90] sm:$0xff]
    %v228 = vld [vmem:[#allocation2 + $0x98] sm:$0xff]
    %v229 = vld [vmem:[#allocation2 + $0xa0] sm:$0xff]
    %v230 = vld [vmem:[#allocation2 + $0xa8] sm:$0xff]
    %v231 = vld [vmem:[#allocation2 + $0xb0] sm:$0x1]
    %v232 = vlaneseq
    %v233 = vshrl.u32 %v232, 7
    %v234 = vsub.s32 0, %v233
    %v235 = vrot.slane %v231, %v234
    %236 = vmatprep.subr.mxu0 0.0
    %237 = vmatpush1.msra.mxu0 0.0
    %238 = vmatprep.subr.mxu0 0.0
    %239 = vmatpush1.msra.mxu0 0.0
    %240 = vmatprep.subr.mxu0 0.0
    %241 = vmatpush1.msra.mxu0 0.0
    %242 = vmatprep.subr.mxu0 0.0
    %243 = vmatpush1.msra.mxu0 0.0
    %244 = vmatprep.subr.mxu0 0.0
    %245 = vmatpush1.msra.mxu0 0.0
    %246 = vmatprep.subr.mxu0 0.0
    %247 = vmatpush1.msra.mxu0 0.0
    %248 = vmatprep.subr.mxu0 0.0
    %249 = vmatpush1.msra.mxu0 0.0
    %250 = vmatprep.subr.mxu0 0.0
    %251 = vmatpush1.msra.mxu0 0.0
    %252 = vmatprep.subr.mxu0 0.0
    %253 = vmatpush1.msra.mxu0 %v230
    %254 = vmatprep.subr.mxu0 0.0
    %255 = vmatpush1.msra.mxu0 %v229
    %256 = vmatprep.subr.mxu0 0.0
    %257 = vmatpush1.msra.mxu0 %v228
    %258 = vmatprep.subr.mxu0 0.0
    %259 = vmatpush1.msra.mxu0 %v227
    %260 = vmatprep.subr.mxu0 0.0
    %261 = vmatpush1.msra.mxu0 %v226
    %262 = vmatprep.subr.mxu0 0.0
    %263 = vmatpush1.msra.mxu0 %v225
    %264 = vmatprep.subr.mxu0 0.0
    %265 = vmatpush1.msra.mxu0 %v224
    %266 = vmatprep.subr.mxu0 0.0
    %267 = vmatpush1.msra.mxu0 %v223
    %268 = vmatprep.subr.mxu0 0.0
    %269 = vmatpush2.msra.mxu0 0.0
    %270 = vmatprep.subr.mxu0 0.0
    %271 = vmatpush2.msra.mxu0 0.0
    %272 = vmatprep.subr.mxu0 0.0
    %273 = vmatpush2.msra.mxu0 0.0
    %274 = vmatprep.subr.mxu0 0.0
    %275 = vmatpush2.msra.mxu0 0.0
    %276 = vmatprep.subr.mxu0 0.0
    %277 = vmatpush2.msra.mxu0 0.0
    %278 = vmatprep.subr.mxu0 0.0
    %279 = vmatpush2.msra.mxu0 0.0
    %280 = vmatprep.subr.mxu0 0.0
    %281 = vmatpush2.msra.mxu0 0.0
    %282 = vmatprep.subr.mxu0 0.0
    %283 = vmatpush2.msra.mxu0 0.0
    %284 = vmatprep.subr.mxu0 0.0
    %285 = vmatpush2.msra.mxu0 0.0
    %286 = vmatprep.subr.mxu0 0.0
    %287 = vmatpush2.msra.mxu0 0.0
    %288 = vmatprep.subr.mxu0 0.0
    %289 = vmatpush2.msra.mxu0 0.0
    %290 = vmatprep.subr.mxu0 0.0
    %291 = vmatpush2.msra.mxu0 0.0
    %292 = vmatprep.subr.mxu0 0.0
    %293 = vmatpush2.msra.mxu0 0.0
    %294 = vmatprep.subr.mxu0 0.0
    %295 = vmatpush2.msra.mxu0 0.0
    %296 = vmatprep.subr.mxu0 0.0
    %297 = vmatpush2.msra.mxu0 0.0
    %298 = vmatprep.subr.mxu0 0.0
    %299 = vmatpush2.msra.mxu0 0.0
    %300 = vmatprep.mubr.f32.mxu0 0.0
    %301 = vmatmul.mubr.f32.gmra.mxu0 %v143
    %v302 = vpop.f32.mrf.mxu0
    %v303 = vadd.f32 %v235, %v302
    %v304 = vpop.f32.mrf.mxu0
    %305 = vmatprep.mubr.f32.mxu0 0.0
    %306 = vmatmul.mubr.f32.gmra.mxu0 %v146
    %v307 = vpop.f32.mrf.mxu0
    %v308 = vadd.f32 %v235, %v307
    %v309 = vpop.f32.mrf.mxu0
    %310 = vdwg.mxu0
    %v311 = vmul.f32 %v303, 0.5
    %v312 = vmul.f32 %v308, 0.5
    %v313 = vmul.f32 %v311, 1.442695
    %v314 = vpow.pop %v313
    %v315 = vmul.f32 %v312, 1.442695
    %v316 = vpow.pop %v315
    %v317 = vld [vmem:[%s2] sm:$0xff]
    %v318 = vld [vmem:[%s2 + $0x8] sm:$0xff]
    %v319 = vmul.f32 %v314, %v317
    %v320 = vmul.f32 %v316, %v318
    %v321 = vadd.f32 %v215, %v319
    %v322 = vadd.f32 %v220, %v320
    %v323 = vld [vmem:[#allocation2 + $0xb8] sm:$0xff]
    %v324 = vld [vmem:[#allocation2 + $0xc0] sm:$0xff]
    %vm325 = vcmask 130048
    %v327 = vsel %vm325, %v321, 0
    %v330 = vsel %vm325, %v322, 0
    %332 = vmatprep.subr.mxu0 0.0
    %333 = vmatpush1.msra.mxu0 0.0
    %334 = vmatprep.subr.mxu0 0.0
    %335 = vmatpush1.msra.mxu0 0.0
    %336 = vmatprep.subr.mxu0 0.0
    %337 = vmatpush1.msra.mxu0 0.0
    %338 = vmatprep.subr.mxu0 0.0
    %339 = vmatpush1.msra.mxu0 0.0
    %340 = vmatprep.subr.mxu0 0.0
    %341 = vmatpush1.msra.mxu0 0.0
    %342 = vmatprep.subr.mxu0 0.0
    %343 = vmatpush1.msra.mxu0 0.0
    %344 = vmatprep.subr.mxu0 0.0
    %345 = vmatpush1.msra.mxu0 0.0
    %346 = vmatprep.subr.mxu0 0.0
    %347 = vmatpush1.msra.mxu0 0.0
    %348 = vmatprep.subr.mxu0 0.0
    %349 = vmatpush1.msra.mxu0 0.0
    %350 = vmatprep.subr.mxu0 0.0
    %351 = vmatpush1.msra.mxu0 0.0
    %352 = vmatprep.subr.mxu0 0.0
    %353 = vmatpush1.msra.mxu0 0.0
    %354 = vmatprep.subr.mxu0 0.0
    %355 = vmatpush1.msra.mxu0 0.0
    %356 = vmatprep.subr.mxu0 0.0
    %357 = vmatpush1.msra.mxu0 0.0
    %358 = vmatprep.subr.mxu0 0.0
    %359 = vmatpush1.msra.mxu0 0.0
    %360 = vmatprep.subr.mxu0 0.0
    %361 = vmatpush1.msra.mxu0 %v324
    %362 = vmatprep.subr.mxu0 0.0
    %363 = vmatpush1.msra.mxu0 %v323
    %364 = vmatprep.subr.mxu0 0.0
    %365 = vmatpush2.msra.mxu0 0.0
    %366 = vmatprep.subr.mxu0 0.0
    %367 = vmatpush2.msra.mxu0 0.0
    %368 = vmatprep.subr.mxu0 0.0
    %369 = vmatpush2.msra.mxu0 0.0
    %370 = vmatprep.subr.mxu0 0.0
    %371 = vmatpush2.msra.mxu0 0.0
    %372 = vmatprep.subr.mxu0 0.0
    %373 = vmatpush2.msra.mxu0 0.0
    %374 = vmatprep.subr.mxu0 0.0
    %375 = vmatpush2.msra.mxu0 0.0
    %376 = vmatprep.subr.mxu0 0.0
    %377 = vmatpush2.msra.mxu0 0.0
    %378 = vmatprep.subr.mxu0 0.0
    %379 = vmatpush2.msra.mxu0 0.0
    %380 = vmatprep.subr.mxu0 0.0
    %381 = vmatpush2.msra.mxu0 0.0
    %382 = vmatprep.subr.mxu0 0.0
    %383 = vmatpush2.msra.mxu0 0.0
    %384 = vmatprep.subr.mxu0 0.0
    %385 = vmatpush2.msra.mxu0 0.0
    %386 = vmatprep.subr.mxu0 0.0
    %387 = vmatpush2.msra.mxu0 0.0
    %388 = vmatprep.subr.mxu0 0.0
    %389 = vmatpush2.msra.mxu0 0.0
    %390 = vmatprep.subr.mxu0 0.0
    %391 = vmatpush2.msra.mxu0 0.0
    %392 = vmatprep.subr.mxu0 0.0
    %393 = vmatpush2.msra.mxu0 0.0
    %394 = vmatprep.subr.mxu0 0.0
    %395 = vmatpush2.msra.mxu0 0.0
    %396 = vmatprep.mubr.f32.mxu0 0.0
    %397 = vmatmul.mubr.f32.gmra.mxu0 %v327
    %v398 = vpop.f32.mrf.mxu0
    %v399 = vadd.f32 0.0, %v398
    %v400 = vpop.f32.mrf.mxu0
    %401 = vmatprep.mubr.f32.mxu0 0.0
    %402 = vmatmul.mubr.f32.gmra.mxu0 %v330
    %v403 = vpop.f32.mrf.mxu0
    %v404 = vadd.f32 0.0, %v403
    %v405 = vpop.f32.mrf.mxu0
    %406 = vdwg.mxu0
    %v407 = vld [vmem:[#allocation2 + $0xc8] sm:$0xff]
    %v408 = vld [vmem:[#allocation2 + $0xd0] sm:$0xff]
    %409 = vmatprep.subr.mxu0 0.0
    %410 = vmatpush1.msra.mxu0 0.0
    %411 = vmatprep.subr.mxu0 0.0
    %412 = vmatpush1.msra.mxu0 0.0
    %413 = vmatprep.subr.mxu0 0.0
    %414 = vmatpush1.msra.mxu0 0.0
    %415 = vmatprep.subr.mxu0 0.0
    %416 = vmatpush1.msra.mxu0 0.0
    %417 = vmatprep.subr.mxu0 0.0
    %418 = vmatpush1.msra.mxu0 0.0
    %419 = vmatprep.subr.mxu0 0.0
    %420 = vmatpush1.msra.mxu0 0.0
    %421 = vmatprep.subr.mxu0 0.0
    %422 = vmatpush1.msra.mxu0 0.0
    %423 = vmatprep.subr.mxu0 0.0
    %424 = vmatpush1.msra.mxu0 0.0
    %425 = vmatprep.subr.mxu0 0.0
    %426 = vmatpush1.msra.mxu0 0.0
    %427 = vmatprep.subr.mxu0 0.0
    %428 = vmatpush1.msra.mxu0 0.0
    %429 = vmatprep.subr.mxu0 0.0
    %430 = vmatpush1.msra.mxu0 0.0
    %431 = vmatprep.subr.mxu0 0.0
    %432 = vmatpush1.msra.mxu0 0.0
    %433 = vmatprep.subr.mxu0 0.0
    %434 = vmatpush1.msra.mxu0 0.0
    %435 = vmatprep.subr.mxu0 0.0
    %436 = vmatpush1.msra.mxu0 0.0
    %437 = vmatprep.subr.mxu0 0.0
    %438 = vmatpush1.msra.mxu0 %v408
    %439 = vmatprep.subr.mxu0 0.0
    %440 = vmatpush1.msra.mxu0 %v407
    %441 = vmatprep.subr.mxu0 0.0
    %442 = vmatpush2.msra.mxu0 0.0
    %443 = vmatprep.subr.mxu0 0.0
    %444 = vmatpush2.msra.mxu0 0.0
    %445 = vmatprep.subr.mxu0 0.0
    %446 = vmatpush2.msra.mxu0 0.0
    %447 = vmatprep.subr.mxu0 0.0
    %448 = vmatpush2.msra.mxu0 0.0
    %449 = vmatprep.subr.mxu0 0.0
    %450 = vmatpush2.msra.mxu0 0.0
    %451 = vmatprep.subr.mxu0 0.0
    %452 = vmatpush2.msra.mxu0 0.0
    %453 = vmatprep.subr.mxu0 0.0
    %454 = vmatpush2.msra.mxu0 0.0
    %455 = vmatprep.subr.mxu0 0.0
    %456 = vmatpush2.msra.mxu0 0.0
    %457 = vmatprep.subr.mxu0 0.0
    %458 = vmatpush2.msra.mxu0 0.0
    %459 = vmatprep.subr.mxu0 0.0
    %460 = vmatpush2.msra.mxu0 0.0
    %461 = vmatprep.subr.mxu0 0.0
    %462 = vmatpush2.msra.mxu0 0.0
    %463 = vmatprep.subr.mxu0 0.0
    %464 = vmatpush2.msra.mxu0 0.0
    %465 = vmatprep.subr.mxu0 0.0
    %466 = vmatpush2.msra.mxu0 0.0
    %467 = vmatprep.subr.mxu0 0.0
    %468 = vmatpush2.msra.mxu0 0.0
    %469 = vmatprep.subr.mxu0 0.0
    %470 = vmatpush2.msra.mxu0 0.0
    %471 = vmatprep.subr.mxu0 0.0
    %472 = vmatpush2.msra.mxu0 0.0
    %473 = vmatprep.mubr.f32.mxu0 0.0
    %474 = vmatmul.mubr.f32.gmra.mxu0 %v327
    %v475 = vpop.f32.mrf.mxu0
    %v476 = vadd.f32 0.0, %v475
    %v477 = vpop.f32.mrf.mxu0
    %478 = vmatprep.mubr.f32.mxu0 0.0
    %479 = vmatmul.mubr.f32.gmra.mxu0 %v330
    %v480 = vpop.f32.mrf.mxu0
    %v481 = vadd.f32 0.0, %v480
    %v482 = vpop.f32.mrf.mxu0
    %483 = vdwg.mxu0
    %v484 = vld [vmem:[%s1] sm:$0xff]
    %v485 = vld [vmem:[%s1 + $0x8] sm:$0xff]
    %v486 = vld [vmem:[%s1 + $0x10] sm:$0xff]
    %v487 = vld [vmem:[%s1 + $0x18] sm:$0xff]
    %v488 = vld [vmem:[#allocation2 + $0xd8] sm:$0xf]
    %vm489 = vcmask 31744
    %v491 = vsel %vm489, %v484, 0
    %v494 = vsel %vm489, %v485, 0
    %v497 = vsel %vm489, %v486, 0
    %v500 = vsel %vm489, %v487, 0
    %vm502 = vcmask 1043456
    %v504 = vsel %vm502, %v488, 0
    %506 = vmatprep.subr.mxu0 0.0
    %507 = vmatpush1.msra.mxu0 0.0
    %508 = vmatprep.subr.mxu0 0.0
    %509 = vmatpush1.msra.mxu0 0.0
    %510 = vmatprep.subr.mxu0 0.0
    %511 = vmatpush1.msra.mxu0 0.0
    %512 = vmatprep.subr.mxu0 0.0
    %513 = vmatpush1.msra.mxu0 0.0
    %514 = vmatprep.subr.mxu0 0.0
    %515 = vmatpush1.msra.mxu0 0.0
    %516 = vmatprep.subr.mxu0 0.0
    %517 = vmatpush1.msra.mxu0 0.0
    %518 = vmatprep.subr.mxu0 0.0
    %519 = vmatpush1.msra.mxu0 0.0
    %520 = vmatprep.subr.mxu0 0.0
    %521 = vmatpush1.msra.mxu0 0.0
    %522 = vmatprep.subr.mxu0 0.0
    %523 = vmatpush1.msra.mxu0 0.0
    %524 = vmatprep.subr.mxu0 0.0
    %525 = vmatpush1.msra.mxu0 0.0
    %526 = vmatprep.subr.mxu0 0.0
    %527 = vmatpush1.msra.mxu0 0.0
    %528 = vmatprep.subr.mxu0 0.0
    %529 = vmatpush1.msra.mxu0 0.0
    %530 = vmatprep.subr.mxu0 0.0
    %531 = vmatpush1.msra.mxu0 0.0
    %532 = vmatprep.subr.mxu0 0.0
    %533 = vmatpush1.msra.mxu0 0.0
    %534 = vmatprep.subr.mxu0 0.0
    %535 = vmatpush1.msra.mxu0 0.0
    %536 = vmatprep.subr.mxu0 0.0
    %537 = vmatpush1.msra.mxu0 %v504
    %538 = vmatprep.subr.mxu0 0.0
    %539 = vmatpush2.msra.mxu0 0.0
    %540 = vmatprep.subr.mxu0 0.0
    %541 = vmatpush2.msra.mxu0 0.0
    %542 = vmatprep.subr.mxu0 0.0
    %543 = vmatpush2.msra.mxu0 0.0
    %544 = vmatprep.subr.mxu0 0.0
    %545 = vmatpush2.msra.mxu0 0.0
    %546 = vmatprep.subr.mxu0 0.0
    %547 = vmatpush2.msra.mxu0 0.0
    %548 = vmatprep.subr.mxu0 0.0
    %549 = vmatpush2.msra.mxu0 0.0
    %550 = vmatprep.subr.mxu0 0.0
    %551 = vmatpush2.msra.mxu0 0.0
    %552 = vmatprep.subr.mxu0 0.0
    %553 = vmatpush2.msra.mxu0 0.0
    %554 = vmatprep.subr.mxu0 0.0
    %555 = vmatpush2.msra.mxu0 0.0
    %556 = vmatprep.subr.mxu0 0.0
    %557 = vmatpush2.msra.mxu0 0.0
    %558 = vmatprep.subr.mxu0 0.0
    %559 = vmatpush2.msra.mxu0 0.0
    %560 = vmatprep.subr.mxu0 0.0
    %561 = vmatpush2.msra.mxu0 0.0
    %562 = vmatprep.subr.mxu0 0.0
    %563 = vmatpush2.msra.mxu0 0.0
    %564 = vmatprep.subr.mxu0 0.0
    %565 = vmatpush2.msra.mxu0 0.0
    %566 = vmatprep.subr.mxu0 0.0
    %567 = vmatpush2.msra.mxu0 0.0
    %568 = vmatprep.subr.mxu0 0.0
    %569 = vmatpush2.msra.mxu0 0.0
    %570 = vmatprep.mubr.f32.mxu0 0.0
    %571 = vmatmul.mubr.f32.gmra.mxu0 %v491
    %v572 = vpop.f32.mrf.mxu0
    %v573 = vadd.f32 0.0, %v572
    %v574 = vpop.f32.mrf.mxu0
    %575 = vmatprep.mubr.f32.mxu0 0.0
    %576 = vmatmul.mubr.f32.gmra.mxu0 %v494
    %v577 = vpop.f32.mrf.mxu0
    %v578 = vadd.f32 0.0, %v577
    %v579 = vpop.f32.mrf.mxu0
    %580 = vmatprep.mubr.f32.mxu0 0.0
    %581 = vmatmul.mubr.f32.gmra.mxu0 %v497
    %v582 = vpop.f32.mrf.mxu0
    %v583 = vadd.f32 0.0, %v582
    %v584 = vpop.f32.mrf.mxu0
    %585 = vmatprep.mubr.f32.mxu0 0.0
    %586 = vmatmul.mubr.f32.gmra.mxu0 %v500
    %v587 = vpop.f32.mrf.mxu0
    %v588 = vadd.f32 0.0, %v587
    %v589 = vpop.f32.mrf.mxu0
    %590 = vdwg.mxu0
    %v591 = vadd.f32 %v399, %v476
    %v592 = vadd.f32 %v404, %v481
    %v593 = vadd.f32 %v404, %v476
    %v594 = vadd.f32 %v399, %v481
    %v595 = vadd.f32 %v591, %v573
    %v596 = vadd.f32 %v592, %v578
    %v597 = vadd.f32 %v593, %v583
    %v598 = vadd.f32 %v594, %v588
    %v599 = vld [vmem:[#allocation2 + $0xe0] sm:$0x1]
    %v600 = vlaneseq
    %v601 = vshrl.u32 %v600, 7
    %v602 = vsub.s32 0, %v601
    %v603 = vrot.slane %v599, %v602
    %v604 = vadd.f32 %v595, %v603
    %v605 = vadd.f32 %v596, %v603
    %v606 = vadd.f32 %v597, %v603
    %v607 = vadd.f32 %v598, %v603
    %v608 = vmax.f32 %v604, 0.0
    %v609 = vmax.f32 %v605, 0.0
    %v610 = vmax.f32 %v606, 0.0
    %v611 = vmax.f32 %v607, 0.0
    %v612 = vld [vmem:[#allocation2 + $0xe8] sm:$0xff]
    %v613 = vld [vmem:[#allocation2 + $0xf0] sm:$0xff]
    %v614 = vld [vmem:[#allocation2 + $0xf8] sm:$0xff]
    %v615 = vld [vmem:[#allocation2 + $0x100] sm:$0xff]
    %v616 = vld [vmem:[#allocation2 + $0x108] sm:$0x1]
    %v617 = vlaneseq
    %v618 = vshrl.u32 %v617, 7
    %v619 = vsub.s32 0, %v618
    %v620 = vrot.slane %v616, %v619
    %v622 = vsel %vm44, %v608, 0
    %v625 = vsel %vm44, %v609, 0
    %v628 = vsel %vm44, %v610, 0
    %v631 = vsel %vm44, %v611, 0
    %633 = vmatprep.subr.mxu0 0.0
    %634 = vmatpush1.msra.mxu0 0.0
    %635 = vmatprep.subr.mxu0 0.0
    %636 = vmatpush1.msra.mxu0 0.0
    %637 = vmatprep.subr.mxu0 0.0
    %638 = vmatpush1.msra.mxu0 0.0
    %639 = vmatprep.subr.mxu0 0.0
    %640 = vmatpush1.msra.mxu0 0.0
    %641 = vmatprep.subr.mxu0 0.0
    %642 = vmatpush1.msra.mxu0 0.0
    %643 = vmatprep.subr.mxu0 0.0
    %644 = vmatpush1.msra.mxu0 0.0
    %645 = vmatprep.subr.mxu0 0.0
    %646 = vmatpush1.msra.mxu0 0.0
    %647 = vmatprep.subr.mxu0 0.0
    %648 = vmatpush1.msra.mxu0 0.0
    %649 = vmatprep.subr.mxu0 0.0
    %650 = vmatpush1.msra.mxu0 0.0
    %651 = vmatprep.subr.mxu0 0.0
    %652 = vmatpush1.msra.mxu0 0.0
    %653 = vmatprep.subr.mxu0 0.0
    %654 = vmatpush1.msra.mxu0 0.0
    %655 = vmatprep.subr.mxu0 0.0
    %656 = vmatpush1.msra.mxu0 0.0
    %657 = vmatprep.subr.mxu0 0.0
    %658 = vmatpush1.msra.mxu0 %v615
    %659 = vmatprep.subr.mxu0 0.0
    %660 = vmatpush1.msra.mxu0 %v614
    %661 = vmatprep.subr.mxu0 0.0
    %662 = vmatpush1.msra.mxu0 %v613
    %663 = vmatprep.subr.mxu0 0.0
    %664 = vmatpush1.msra.mxu0 %v612
    %665 = vmatprep.subr.mxu0 0.0
    %666 = vmatpush2.msra.mxu0 0.0
    %667 = vmatprep.subr.mxu0 0.0
    %668 = vmatpush2.msra.mxu0 0.0
    %669 = vmatprep.subr.mxu0 0.0
    %670 = vmatpush2.msra.mxu0 0.0
    %671 = vmatprep.subr.mxu0 0.0
    %672 = vmatpush2.msra.mxu0 0.0
    %673 = vmatprep.subr.mxu0 0.0
    %674 = vmatpush2.msra.mxu0 0.0
    %675 = vmatprep.subr.mxu0 0.0
    %676 = vmatpush2.msra.mxu0 0.0
    %677 = vmatprep.subr.mxu0 0.0
    %678 = vmatpush2.msra.mxu0 0.0
    %679 = vmatprep.subr.mxu0 0.0
    %680 = vmatpush2.msra.mxu0 0.0
    %681 = vmatprep.subr.mxu0 0.0
    %682 = vmatpush2.msra.mxu0 0.0
    %683 = vmatprep.subr.mxu0 0.0
    %684 = vmatpush2.msra.mxu0 0.0
    %685 = vmatprep.subr.mxu0 0.0
    %686 = vmatpush2.msra.mxu0 0.0
    %687 = vmatprep.subr.mxu0 0.0
    %688 = vmatpush2.msra.mxu0 0.0
    %689 = vmatprep.subr.mxu0 0.0
    %690 = vmatpush2.msra.mxu0 0.0
    %691 = vmatprep.subr.mxu0 0.0
    %692 = vmatpush2.msra.mxu0 0.0
    %693 = vmatprep.subr.mxu0 0.0
    %694 = vmatpush2.msra.mxu0 0.0
    %695 = vmatprep.subr.mxu0 0.0
    %696 = vmatpush2.msra.mxu0 0.0
    %697 = vmatprep.mubr.f32.mxu0 0.0
    %698 = vmatmul.mubr.f32.gmra.mxu0 %v622
    %v699 = vpop.f32.mrf.mxu0
    %v700 = vadd.f32 %v620, %v699
    %v701 = vpop.f32.mrf.mxu0
    %702 = vmatprep.mubr.f32.mxu0 0.0
    %703 = vmatmul.mubr.f32.gmra.mxu0 %v625
    %v704 = vpop.f32.mrf.mxu0
    %v705 = vadd.f32 %v620, %v704
    %v706 = vpop.f32.mrf.mxu0
    %707 = vmatprep.mubr.f32.mxu0 0.0
    %708 = vmatmul.mubr.f32.gmra.mxu0 %v628
    %v709 = vpop.f32.mrf.mxu0
    %v710 = vadd.f32 %v620, %v709
    %v711 = vpop.f32.mrf.mxu0
    %712 = vmatprep.mubr.f32.mxu0 0.0
    %713 = vmatmul.mubr.f32.gmra.mxu0 %v631
    %v714 = vpop.f32.mrf.mxu0
    %v715 = vadd.f32 %v620, %v714
    %v716 = vpop.f32.mrf.mxu0
    %717 = vdwg.mxu0
    %718 = vst.msk [vmem:[%s4] sm:$0xff] %vm44, %v700
    %719 = vst.msk [vmem:[%s4 + $0x8] sm:$0xff] %vm44, %v705
    %720 = vst.msk [vmem:[%s4 + $0x10] sm:$0xff] %vm44, %v710
    %721 = vst.msk [vmem:[%s4 + $0x18] sm:$0xff] %vm44, %v715
    %722 = vst.msk [vmem:[%s5] sm:$0xff] %vm325, %v215
    %723 = vst.msk [vmem:[%s5 + $0x8] sm:$0xff] %vm325, %v220
    %724 = vst.msk [vmem:[%s5 + $0x10] sm:$0xff] %vm325, %v303
    %725 = vst.msk [vmem:[%s5 + $0x18] sm:$0xff] %vm325, %v308
    // Predicated region
    $region22: #{fwd.1} parent=1 // pred_check
      _
    $region23: #{fwd.1} parent=1 // pred_check_branch
      %727 = sbr.rel (0) target = $region25
    $region24: #{fwd.1} parent=1 // pred_region
      _
    $region25: #{fwd.1} parent=1 // pred_fallthru
      _
    // Predicated region
    $region26: #{fwd.1} parent=1 // pred_check
      _
    $region27: #{fwd.1} parent=1 // pred_check_branch
      %729 = sbr.rel (0) target = $region29
    $region28: #{fwd.1} parent=1 // pred_region
      _
    $region29: #{fwd.1} parent=1 // pred_fallthru
      _
    // Predicated region
    $region30: #{fwd.1} parent=1 // pred_check
      _
    $region31: #{fwd.1} parent=1 // pred_check_branch
      %731 = sbr.rel (0) target = $region33
    $region32: #{fwd.1} parent=1 // pred_region
      _
    $region33: #{fwd.1} parent=1 // pred_fallthru
      _
    // Predicated region
    $region34: #{fwd.1} parent=1 // pred_check
      _
    $region35: #{fwd.1} parent=1 // pred_check_branch
      %733 = sbr.rel (0) target = $region37
    $region36: #{fwd.1} parent=1 // pred_region
      _
    $region37: #{fwd.1} parent=1 // pred_fallthru
      _
    %734 = vsyncpa [#allocation3], 1

</llo_original>
